<compile_context>
chip_gen: v5e
topology: v5e:2x2
jax: 0.10.0
libtpu: 0.0.40
codegen_flags: <defaults>
</compile_context>

<pallas_src>
import functools
import math

import jax
import jax.numpy as jnp
from jax import lax
from jax.experimental import pallas as pl
from jax.experimental.pallas import tpu as pltpu


def _critic_kernel(n_mid, s_ref, a_ref, *refs):
    """Fused MLP over one batch tile.

    s_ref: (TB, Ds)   batch-major state block
    a_ref: (TB, Da)   batch-major action block
    refs:  [w0sT (H0,Ds) bf16, w0aT (H0,Da) bf16, b0 (H0,1) f32,
            w1T (H1,H0) bf16,  b1 (H1,1) f32, ...,            # n_mid hidden layers
            w_last (H,1) f32,  b_last (1,1) f32,
            out_ref (1, TB)]
    """
    out_ref = refs[-1]
    w = refs[:-1]

    # --- layer 0: fused torch.cat via split first-layer weight ------------
    # contract the feature axis of both operands: (H0, D) x (TB, D) -> (H0, TB)
    dn = (((1,), (1,)), ((), ()))
    sb = s_ref[...].astype(jnp.bfloat16)
    ab = a_ref[...].astype(jnp.bfloat16)
    h = (lax.dot_general(w[0][...], sb, dn, preferred_element_type=jnp.float32)
         + lax.dot_general(w[1][...], ab, dn, preferred_element_type=jnp.float32)
         + w[2][...])
    h = jnp.maximum(h, 0.0)                                   # ReLU (f32, VPU)

    # --- hidden layers (feature-major, lane-dense matmuls) ----------------
    for li in range(n_mid):                                   # static unrolled
        wT = w[3 + 2 * li][...]                               # (H_out, H_in) bf16
        b = w[4 + 2 * li][...]                                # (H_out, 1)  f32
        h = jnp.dot(wT, h.astype(jnp.bfloat16),
                    preferred_element_type=jnp.float32) + b
        h = jnp.maximum(h, 0.0)

    # --- final width-1 layer: VPU multiply + sublane reduce (skip M=1 MXU) -
    w_last = w[3 + 2 * n_mid][...]                            # (H, 1) f32
    b_last = w[4 + 2 * n_mid][...]                            # (1, 1) f32
    out = jnp.sum(w_last * h, axis=0, keepdims=True) + b_last  # (1, TB)
    out_ref[...] = out.astype(out_ref.dtype)                   # lane-dense store


def critic_forward(params, state, action, *, tb=None, num_tiles=2):
    """params: list of (w, b) with w shaped (in, out), b shaped (out,).

    state: (B, Ds) f32, action: (B, Da) f32  ->  (B, 1) f32.
    """
    B, Ds = state.shape
    Da = action.shape[1]
    n_layers = len(params)
    assert n_layers >= 2, "expected at least one hidden layer + output layer"
    assert params[0][0].shape[0] == Ds + Da
    assert params[-1][0].shape[1] == 1, "Critic output width must be 1"

    if tb is None:
        tb = -(-B // max(1, num_tiles))
        tb = -(-tb // 128) * 128            # lane-dense output blocks
    G = -(-B // tb)                         # ceil(B / tb)
    Bp = G * tb

    # ---- pack weights into kernel layout (tiny, done once per param set) --
    # In a training/serving loop these would be pre-packed and cached.
    flat = []
    w0, b0 = params[0]
    w0 = jnp.asarray(w0, jnp.float32)
    flat.append(jnp.transpose(w0[:Ds]).astype(jnp.bfloat16))   # (H0, Ds)
    flat.append(jnp.transpose(w0[Ds:]).astype(jnp.bfloat16))   # (H0, Da)
    flat.append(jnp.asarray(b0, jnp.float32).reshape(-1, 1))   # (H0, 1)
    for w_, b_ in params[1:-1]:
        flat.append(jnp.transpose(jnp.asarray(w_, jnp.float32)).astype(jnp.bfloat16))
        flat.append(jnp.asarray(b_, jnp.float32).reshape(-1, 1))
    w_last, b_last = params[-1]
    flat.append(jnp.asarray(w_last, jnp.float32))              # (H, 1) f32 (VPU path)
    flat.append(jnp.asarray(b_last, jnp.float32).reshape(1, 1))
    n_mid = n_layers - 2

    in_specs = [
        pl.BlockSpec((tb, Ds), lambda i: (i, 0)),
        pl.BlockSpec((tb, Da), lambda i: (i, 0)),
    ]
    for arr in flat:
        # full-array blocks, constant index_map -> resident in VMEM across grid
        in_specs.append(pl.BlockSpec(arr.shape, lambda i, nd=arr.ndim: (0,) * nd))
    out_spec = pl.BlockSpec((1, tb), lambda i: (0, i))

    out = pl.pallas_call(
        functools.partial(_critic_kernel, n_mid),
        out_shape=jax.ShapeDtypeStruct((1, Bp), jnp.float32),
        grid_spec=pltpu.PrefetchScalarGridSpec(
            num_scalar_prefetch=0,
            grid=(G,),
            in_specs=in_specs,
            out_specs=out_spec,
        ),
        compiler_params=pltpu.CompilerParams(
            dimension_semantics=("parallel",)),
    )(state, action, *flat)

    return out.reshape(Bp, 1)[:B]           # free bitcast reshape + slice -> (B, 1)


def init_params(key, dims):
    """PyTorch nn.Linear default init: U(-1/sqrt(fan_in), 1/sqrt(fan_in))."""
    params = []
    for i in range(len(dims) - 1):
        key, kw, kb = jax.random.split(key, 3)
        bound = 1.0 / math.sqrt(dims[i])
        w = jax.random.uniform(kw, (dims[i], dims[i + 1]), jnp.float32, -bound, bound)
        b = jax.random.uniform(kb, (dims[i + 1],), jnp.float32, -bound, bound)
        params.append((w, b))
    return params


def reference_forward(params, state, action):
    hi = jax.lax.Precision.HIGHEST
    h = jnp.concatenate([state, action], axis=-1)
    for li, (w, b) in enumerate(params):
        h = jnp.dot(h, w, precision=hi) + b
        if li < len(params) - 1:
            h = jnp.maximum(h, 0.0)
    return h


if __name__ == "__main__":
    key = jax.random.PRNGKey(0)
    kp, ks, ka = jax.random.split(key, 3)

    B, STATE_DIM, ACTION_DIM = 512, 24, 4     # 512 rows -> 2 parallel tiles of 256
    HIDDEN_SIZES = (128, 128)                 # config.hidden_sizes
    dims = [STATE_DIM + ACTION_DIM] + list(HIDDEN_SIZES) + [1]

    params = init_params(kp, dims)
    state = jax.random.uniform(ks, (B, STATE_DIM), jnp.float32, -1.0, 1.0)
    action = jax.random.uniform(ka, (B, ACTION_DIM), jnp.float32, -1.0, 1.0)

    out = critic_forward(params, state, action)
    out = jax.block_until_ready(out)

    ref = reference_forward(params, state, action)
    assert out.shape == (B, 1), out.shape
    assert jnp.allclose(out, ref, rtol=1e-2, atol=1e-2), (out, ref)
    print("KERNEL_OK")
</pallas_src>

<mosaic_0001>
module attributes {stable_mosaic.version = 11 : i64} {
  func.func @_critic_kernel(%arg0: i32, %arg1: memref<256x24xf32, #tpu.memory_space<vmem>>, %arg2: memref<256x4xf32, #tpu.memory_space<vmem>>, %arg3: memref<128x24xbf16, #tpu.memory_space<vmem>>, %arg4: memref<128x4xbf16, #tpu.memory_space<vmem>>, %arg5: memref<128x1xf32, #tpu.memory_space<vmem>>, %arg6: memref<128x128xbf16, #tpu.memory_space<vmem>>, %arg7: memref<128x1xf32, #tpu.memory_space<vmem>>, %arg8: memref<128x1xf32, #tpu.memory_space<vmem>>, %arg9: memref<1x1xf32, #tpu.memory_space<vmem>>, %arg10: memref<1x256xf32, #tpu.memory_space<vmem>>) attributes {dimension_semantics = [#tpu.dimension_semantics<parallel>], iteration_bounds = array<i64: 2>, scalar_prefetch = 0 : i64, scratch_operands = 0 : i64, tpu.core_type = #tpu.core_type<tc>, window_params = [{transform_indices = @transform_0, window_bounds = array<i64: 256, 24>}, {transform_indices = @transform_1, window_bounds = array<i64: 256, 4>}, {pipeline_mode = #tpu.pipeline_mode<synchronous>, transform_indices = @transform_2, window_bounds = array<i64: 128, 24>}, {pipeline_mode = #tpu.pipeline_mode<synchronous>, transform_indices = @transform_3, window_bounds = array<i64: 128, 4>}, {pipeline_mode = #tpu.pipeline_mode<synchronous>, transform_indices = @transform_4, window_bounds = array<i64: 128, 1>}, {pipeline_mode = #tpu.pipeline_mode<synchronous>, transform_indices = @transform_5, window_bounds = array<i64: 128, 128>}, {pipeline_mode = #tpu.pipeline_mode<synchronous>, transform_indices = @transform_6, window_bounds = array<i64: 128, 1>}, {pipeline_mode = #tpu.pipeline_mode<synchronous>, transform_indices = @transform_7, window_bounds = array<i64: 128, 1>}, {pipeline_mode = #tpu.pipeline_mode<synchronous>, transform_indices = @transform_8, window_bounds = array<i64: 1, 1>}, {transform_indices = @transform_9, window_bounds = array<i64: 1, 256>}]} {
    %c0 = arith.constant 0 : index
    %c0_0 = arith.constant 0 : index
    %0 = vector.load %arg1[%c0, %c0_0] : memref<256x24xf32, #tpu.memory_space<vmem>>, vector<256x24xf32>
    %1 = arith.truncf %0 : vector<256x24xf32> to vector<256x24xbf16>
    %c0_1 = arith.constant 0 : index
    %c0_2 = arith.constant 0 : index
    %2 = vector.load %arg2[%c0_1, %c0_2] : memref<256x4xf32, #tpu.memory_space<vmem>>, vector<256x4xf32>
    %3 = arith.truncf %2 : vector<256x4xf32> to vector<256x4xbf16>
    %c0_3 = arith.constant 0 : index
    %c0_4 = arith.constant 0 : index
    %4 = vector.load %arg3[%c0_3, %c0_4] : memref<128x24xbf16, #tpu.memory_space<vmem>>, vector<128x24xbf16>
    %cst = arith.constant dense<0.000000e+00> : vector<128x256xf32>
    %5 = tpu.matmul %4, %1, %cst {dimension_numbers = #tpu.dot_dimension_numbers<[1], [1], [0], [0], [0, 0, 1, 0], [], []>} : vector<128x24xbf16>, vector<256x24xbf16>, vector<128x256xf32> -> vector<128x256xf32>
    %c0_5 = arith.constant 0 : index
    %c0_6 = arith.constant 0 : index
    %6 = vector.load %arg4[%c0_5, %c0_6] : memref<128x4xbf16, #tpu.memory_space<vmem>>, vector<128x4xbf16>
    %cst_7 = arith.constant dense<0.000000e+00> : vector<128x256xf32>
    %7 = tpu.matmul %6, %3, %cst_7 {dimension_numbers = #tpu.dot_dimension_numbers<[1], [1], [0], [0], [0, 0, 1, 0], [], []>} : vector<128x4xbf16>, vector<256x4xbf16>, vector<128x256xf32> -> vector<128x256xf32>
    %8 = arith.addf %5, %7 : vector<128x256xf32>
    %c0_8 = arith.constant 0 : index
    %c0_9 = arith.constant 0 : index
    %9 = vector.load %arg5[%c0_8, %c0_9] : memref<128x1xf32, #tpu.memory_space<vmem>>, vector<128x1xf32>
    %10 = vector.broadcast %9 : vector<128x1xf32> to vector<128x256xf32>
    %11 = arith.addf %8, %10 : vector<128x256xf32>
    %cst_10 = arith.constant 0.000000e+00 : f32
    %12 = vector.broadcast %cst_10 : f32 to vector<128x256xf32>
    %13 = arith.maximumf %11, %12 : vector<128x256xf32>
    %c0_11 = arith.constant 0 : index
    %c0_12 = arith.constant 0 : index
    %14 = vector.load %arg6[%c0_11, %c0_12] : memref<128x128xbf16, #tpu.memory_space<vmem>>, vector<128x128xbf16>
    %c0_13 = arith.constant 0 : index
    %c0_14 = arith.constant 0 : index
    %15 = vector.load %arg7[%c0_13, %c0_14] : memref<128x1xf32, #tpu.memory_space<vmem>>, vector<128x1xf32>
    %16 = arith.truncf %13 : vector<128x256xf32> to vector<128x256xbf16>
    %cst_15 = arith.constant dense<0.000000e+00> : vector<128x256xf32>
    %17 = tpu.matmul %14, %16, %cst_15 {dimension_numbers = #tpu.dot_dimension_numbers<[1], [0], [0], [1], [0, 0, 1, 1], [], []>} : vector<128x128xbf16>, vector<128x256xbf16>, vector<128x256xf32> -> vector<128x256xf32>
    %18 = vector.broadcast %15 : vector<128x1xf32> to vector<128x256xf32>
    %19 = arith.addf %17, %18 : vector<128x256xf32>
    %cst_16 = arith.constant 0.000000e+00 : f32
    %20 = vector.broadcast %cst_16 : f32 to vector<128x256xf32>
    %21 = arith.maximumf %19, %20 : vector<128x256xf32>
    %c0_17 = arith.constant 0 : index
    %c0_18 = arith.constant 0 : index
    %22 = vector.load %arg8[%c0_17, %c0_18] : memref<128x1xf32, #tpu.memory_space<vmem>>, vector<128x1xf32>
    %c0_19 = arith.constant 0 : index
    %c0_20 = arith.constant 0 : index
    %23 = vector.load %arg9[%c0_19, %c0_20] : memref<1x1xf32, #tpu.memory_space<vmem>>, vector<1x1xf32>
    %24 = vector.broadcast %22 : vector<128x1xf32> to vector<128x256xf32>
    %25 = arith.mulf %24, %21 : vector<128x256xf32>
    %cst_21 = arith.constant dense<0.000000e+00> : vector<256xf32>
    %26 = vector.multi_reduction <add>, %25, %cst_21 [0] : vector<128x256xf32> to vector<256xf32>
    %27 = vector.shape_cast %26 : vector<256xf32> to vector<1x256xf32>
    %28 = vector.broadcast %23 : vector<1x1xf32> to vector<1x256xf32>
    %29 = arith.addf %27, %28 : vector<1x256xf32>
    %c0_22 = arith.constant 0 : index
    %c0_23 = arith.constant 0 : index
    %30 = vector.load %arg10[%c0_22, %c0_23] : memref<1x256xf32, #tpu.memory_space<vmem>>, vector<1x256xf32>
    tpu.vector_store %arg10[%c0_22, %c0_23], %29 {strides = array<i32>} : memref<1x256xf32, #tpu.memory_space<vmem>>, vector<1x256xf32>,
    return
  }
  func.func @transform_0(%arg0: i32) -> (i32, i32) {
    %c0_i32 = arith.constant 0 : i32
    %c0_i32_0 = arith.constant 0 : i32
    return %arg0, %c0_i32 : i32, i32
  }
  func.func @transform_1(%arg0: i32) -> (i32, i32) {
    %c0_i32 = arith.constant 0 : i32
    %c0_i32_0 = arith.constant 0 : i32
    return %arg0, %c0_i32 : i32, i32
  }
  func.func @transform_2(%arg0: i32) -> (i32, i32) {
    %c0_i32 = arith.constant 0 : i32
    %c0_i32_0 = arith.constant 0 : i32
    %c0_i32_1 = arith.constant 0 : i32
    return %c0_i32, %c0_i32_0 : i32, i32
  }
  func.func @transform_3(%arg0: i32) -> (i32, i32) {
    %c0_i32 = arith.constant 0 : i32
    %c0_i32_0 = arith.constant 0 : i32
    %c0_i32_1 = arith.constant 0 : i32
    return %c0_i32, %c0_i32_0 : i32, i32
  }
  func.func @transform_4(%arg0: i32) -> (i32, i32) {
    %c0_i32 = arith.constant 0 : i32
    %c0_i32_0 = arith.constant 0 : i32
    %c0_i32_1 = arith.constant 0 : i32
    return %c0_i32, %c0_i32_0 : i32, i32
  }
  func.func @transform_5(%arg0: i32) -> (i32, i32) {
    %c0_i32 = arith.constant 0 : i32
    %c0_i32_0 = arith.constant 0 : i32
    %c0_i32_1 = arith.constant 0 : i32
    return %c0_i32, %c0_i32_0 : i32, i32
  }
  func.func @transform_6(%arg0: i32) -> (i32, i32) {
    %c0_i32 = arith.constant 0 : i32
    %c0_i32_0 = arith.constant 0 : i32
    %c0_i32_1 = arith.constant 0 : i32
    return %c0_i32, %c0_i32_0 : i32, i32
  }
  func.func @transform_7(%arg0: i32) -> (i32, i32) {
    %c0_i32 = arith.constant 0 : i32
    %c0_i32_0 = arith.constant 0 : i32
    %c0_i32_1 = arith.constant 0 : i32
    return %c0_i32, %c0_i32_0 : i32, i32
  }
  func.func @transform_8(%arg0: i32) -> (i32, i32) {
    %c0_i32 = arith.constant 0 : i32
    %c0_i32_0 = arith.constant 0 : i32
    %c0_i32_1 = arith.constant 0 : i32
    return %c0_i32, %c0_i32_0 : i32, i32
  }
  func.func @transform_9(%arg0: i32) -> (i32, i32) {
    %c0_i32 = arith.constant 0 : i32
    %c0_i32_0 = arith.constant 0 : i32
    return %c0_i32, %arg0 : i32, i32
  }
}

</mosaic_0001>

<llo_original>
// kernel: tpu_custom_call.1
$region0: #{tpu_custom_call.1}
  #allocation0 [shape = 'u32[]', space=smem, size = 0x4, offset = 0x4, fixed_abs, tag = 'smem constant byte address 0x4 - core index']
  #allocation1 [shape = 'u32[72,128]{1,0:T(1,128)}', space=vmem, size = 0x9000, scoped, tag = 'internal scratch']
  #allocation2 [shape = 'f32[1,1]{1,0:T(1,128)S(1)}', space=vmem, size = 0x200, scoped, tag = 'scoped memory for tpu_custom_call.1']
  %s0 = inlined_call_operand.vmem [shape: f32[512,24], index: 0, kind: input, shape index: {}]
  %s1 = inlined_call_operand.vmem [shape: f32[512,4], index: 1, kind: input, shape index: {}]
  %s2 = inlined_call_operand.vmem [shape: bf16[128,24], index: 2, kind: input, shape index: {}]
  %s3 = inlined_call_operand.vmem [shape: bf16[128,4], index: 3, kind: input, shape index: {}]
  %s4 = inlined_call_operand.vmem [shape: f32[128,1], index: 4, kind: input, shape index: {}]
  %s5 = inlined_call_operand.vmem [shape: bf16[128,128], index: 5, kind: input, shape index: {}]
  %s6 = inlined_call_operand.vmem [shape: f32[128,1], index: 6, kind: input, shape index: {}]
  %s7 = inlined_call_operand.vmem [shape: f32[128,1], index: 7, kind: input, shape index: {}]
  %s8 = inlined_call_operand.<no memory space> [shape: f32[1,1], index: 8, kind: input, shape index: {}]
  %s9 = inlined_call_operand.hbm [shape: f32[1,512], index: 9, kind: output, shape index: {}]
  %s10 = sld [smem:[#allocation0]]
  $region69: #{tpu_custom_call.1} parent=0
    _
  %s12 = ssub.s32 1, %s10
  %s13 = scalar_select 0, %s12, %s10
  %v14 = vstv %s8
  %15 = vst [vmem:[#allocation2] sm:$0x1] %v14
  $region1: #{tpu_custom_call.1} parent=0
    #allocation3 [shape = 'u8[2048]{0}', space=vmem, size = 0x800, scoped, tag = 'output window, operand 0']
    #allocation4 [shape = 's32[2]{0}', space=sflag, size = 0x8, scoped, tag = 'scoped memory for tpu_custom_call.1']
    %16 = vsyncpa [#allocation4], 0
    %s17 = scalar_lea.sflag [#allocation4], 1
    %18 = vsyncpa %s17, 0
    loop: start=0, step=1, limit=4
    $region2: #{tpu_custom_call.1} parent=1 // loop_pre_header
      _
    $region3: #{tpu_custom_call.1} parent=1 // loop_header
      %s20 = sphi 0, %s24
      %p21 = scmp.ge.s32.totalorder %s20, 4
      %s30 = sphi 0, %s32
      %s33 = sphi 0, %s30
      %s34 = sphi 0, %s33
      %s50 = sphi 0, %s34
      %s56 = sphi 0, %s58
      %s59 = sphi 0, %s56
      %s60 = sphi 0, %s59
      %s76 = sphi 0, %s60
      %s80 = sphi 0, %s80
      %s82 = sphi 0, %s80
      %s83 = sphi 0, %s82
      %s97 = sphi 0, %s83
      %s101 = sphi 0, %s101
      %s103 = sphi 0, %s101
      %s104 = sphi 0, %s103
      %s118 = sphi 0, %s104
      %s122 = sphi 0, %s122
      %s124 = sphi 0, %s122
      %s125 = sphi 0, %s124
      %s139 = sphi 0, %s125
      %s143 = sphi 0, %s143
      %s145 = sphi 0, %s143
      %s146 = sphi 0, %s145
      %s160 = sphi 0, %s146
      %s164 = sphi 0, %s164
      %s166 = sphi 0, %s164
      %s167 = sphi 0, %s166
      %s181 = sphi 0, %s167
      %s185 = sphi 0, %s185
      %s187 = sphi 0, %s185
      %s188 = sphi 0, %s187
      %s202 = sphi 0, %s188
      %s206 = sphi 0, %s206
      %s208 = sphi 0, %s206
      %s209 = sphi 0, %s208
      %s223 = sphi 0, %s209
      %s229 = sphi 0, %s231
      %s232 = sphi 0, %s229
      %s233 = sphi 0, %s232
      %s249 = sphi 0, %s233
    $region4: #{tpu_custom_call.1} parent=1 // loop_header_branch
      %23 = sbr.rel (%p21) target = $region8
    $region5: #{tpu_custom_call.1} parent=1 // loop_body
      %s25 = ssub.s32 %s20, 1
      %s26 = ssub.s32 %s20, 2
      %s27 = sadd.s32 %s20, 1
      %s28 = ssub.s32 %s20, %s27
      %p29 = scmp.eq.s32.totalorder %s28, 0
      %s31 = sadd.s32 %s30, 1
      %s32 = scalar_select %p29, %s30, %s31
      %p35 = pneg %p29
      %p36 = scmp.eq.s32.totalorder %s20, 1
      %p37 = por %p35, %p36
      %p38 = scmp.ne.s32.totalorder %s30, %s33
      %p39 = scmp.eq.s32.totalorder %s20, 0
      %p40 = por %p38, %p39
      %p41 = scmp.ne.s32.totalorder %s30, %s33
      %p42 = scmp.eq.s32.totalorder %s25, 1
      %p43 = por %p41, %p42
      %p44 = scmp.ne.s32.totalorder %s33, %s34
      %p45 = scmp.eq.s32.totalorder %s25, 0
      %p46 = por %p44, %p45
      %p47 = scmp.ne.s32.totalorder %s33, %s34
      %p48 = scmp.eq.s32.totalorder %s26, 1
      %p49 = por %p47, %p48
      %p51 = scmp.ne.s32.totalorder %s34, %s50
      %p52 = scmp.eq.s32.totalorder %s26, 0
      %p53 = por %p51, %p52
      %s54 = ssub.s32 %s20, %s27
      %p55 = scmp.eq.s32.totalorder %s54, 0
      %s57 = sadd.s32 %s56, 1
      %s58 = scalar_select %p55, %s56, %s57
      %p61 = pneg %p55
      %p62 = scmp.eq.s32.totalorder %s20, 1
      %p63 = por %p61, %p62
      %p64 = scmp.ne.s32.totalorder %s56, %s59
      %p65 = scmp.eq.s32.totalorder %s20, 0
      %p66 = por %p64, %p65
      %p67 = scmp.ne.s32.totalorder %s56, %s59
      %p68 = scmp.eq.s32.totalorder %s25, 1
      %p69 = por %p67, %p68
      %p70 = scmp.ne.s32.totalorder %s59, %s60
      %p71 = scmp.eq.s32.totalorder %s25, 0
      %p72 = por %p70, %p71
      %p73 = scmp.ne.s32.totalorder %s59, %s60
      %p74 = scmp.eq.s32.totalorder %s26, 1
      %p75 = por %p73, %p74
      %p77 = scmp.ne.s32.totalorder %s60, %s76
      %p78 = scmp.eq.s32.totalorder %s26, 0
      %p79 = por %p77, %p78
      %s81 = sadd.s32 %s80, 1
      %p84 = scmp.eq.s32.totalorder %s20, 1
      %p85 = scmp.ne.s32.totalorder %s80, %s82
      %p86 = scmp.eq.s32.totalorder %s20, 0
      %p87 = por %p85, %p86
      %p88 = scmp.ne.s32.totalorder %s80, %s82
      %p89 = scmp.eq.s32.totalorder %s25, 1
      %p90 = por %p88, %p89
      %p91 = scmp.ne.s32.totalorder %s82, %s83
      %p92 = scmp.eq.s32.totalorder %s25, 0
      %p93 = por %p91, %p92
      %p94 = scmp.ne.s32.totalorder %s82, %s83
      %p95 = scmp.eq.s32.totalorder %s26, 1
      %p96 = por %p94, %p95
      %p98 = scmp.ne.s32.totalorder %s83, %s97
      %p99 = scmp.eq.s32.totalorder %s26, 0
      %p100 = por %p98, %p99
      %s102 = sadd.s32 %s101, 1
      %p105 = scmp.eq.s32.totalorder %s20, 1
      %p106 = scmp.ne.s32.totalorder %s101, %s103
      %p107 = scmp.eq.s32.totalorder %s20, 0
      %p108 = por %p106, %p107
      %p109 = scmp.ne.s32.totalorder %s101, %s103
      %p110 = scmp.eq.s32.totalorder %s25, 1
      %p111 = por %p109, %p110
      %p112 = scmp.ne.s32.totalorder %s103, %s104
      %p113 = scmp.eq.s32.totalorder %s25, 0
      %p114 = por %p112, %p113
      %p115 = scmp.ne.s32.totalorder %s103, %s104
      %p116 = scmp.eq.s32.totalorder %s26, 1
      %p117 = por %p115, %p116
      %p119 = scmp.ne.s32.totalorder %s104, %s118
      %p120 = scmp.eq.s32.totalorder %s26, 0
      %p121 = por %p119, %p120
      %s123 = sadd.s32 %s122, 1
      %p126 = scmp.eq.s32.totalorder %s20, 1
      %p127 = scmp.ne.s32.totalorder %s122, %s124
      %p128 = scmp.eq.s32.totalorder %s20, 0
      %p129 = por %p127, %p128
      %p130 = scmp.ne.s32.totalorder %s122, %s124
      %p131 = scmp.eq.s32.totalorder %s25, 1
      %p132 = por %p130, %p131
      %p133 = scmp.ne.s32.totalorder %s124, %s125
      %p134 = scmp.eq.s32.totalorder %s25, 0
      %p135 = por %p133, %p134
      %p136 = scmp.ne.s32.totalorder %s124, %s125
      %p137 = scmp.eq.s32.totalorder %s26, 1
      %p138 = por %p136, %p137
      %p140 = scmp.ne.s32.totalorder %s125, %s139
      %p141 = scmp.eq.s32.totalorder %s26, 0
      %p142 = por %p140, %p141
      %s144 = sadd.s32 %s143, 1
      %p147 = scmp.eq.s32.totalorder %s20, 1
      %p148 = scmp.ne.s32.totalorder %s143, %s145
      %p149 = scmp.eq.s32.totalorder %s20, 0
      %p150 = por %p148, %p149
      %p151 = scmp.ne.s32.totalorder %s143, %s145
      %p152 = scmp.eq.s32.totalorder %s25, 1
      %p153 = por %p151, %p152
      %p154 = scmp.ne.s32.totalorder %s145, %s146
      %p155 = scmp.eq.s32.totalorder %s25, 0
      %p156 = por %p154, %p155
      %p157 = scmp.ne.s32.totalorder %s145, %s146
      %p158 = scmp.eq.s32.totalorder %s26, 1
      %p159 = por %p157, %p158
      %p161 = scmp.ne.s32.totalorder %s146, %s160
      %p162 = scmp.eq.s32.totalorder %s26, 0
      %p163 = por %p161, %p162
      %s165 = sadd.s32 %s164, 1
      %p168 = scmp.eq.s32.totalorder %s20, 1
      %p169 = scmp.ne.s32.totalorder %s164, %s166
      %p170 = scmp.eq.s32.totalorder %s20, 0
      %p171 = por %p169, %p170
      %p172 = scmp.ne.s32.totalorder %s164, %s166
      %p173 = scmp.eq.s32.totalorder %s25, 1
      %p174 = por %p172, %p173
      %p175 = scmp.ne.s32.totalorder %s166, %s167
      %p176 = scmp.eq.s32.totalorder %s25, 0
      %p177 = por %p175, %p176
      %p178 = scmp.ne.s32.totalorder %s166, %s167
      %p179 = scmp.eq.s32.totalorder %s26, 1
      %p180 = por %p178, %p179
      %p182 = scmp.ne.s32.totalorder %s167, %s181
      %p183 = scmp.eq.s32.totalorder %s26, 0
      %p184 = por %p182, %p183
      %s186 = sadd.s32 %s185, 1
      %p189 = scmp.eq.s32.totalorder %s20, 1
      %p190 = scmp.ne.s32.totalorder %s185, %s187
      %p191 = scmp.eq.s32.totalorder %s20, 0
      %p192 = por %p190, %p191
      %p193 = scmp.ne.s32.totalorder %s185, %s187
      %p194 = scmp.eq.s32.totalorder %s25, 1
      %p195 = por %p193, %p194
      %p196 = scmp.ne.s32.totalorder %s187, %s188
      %p197 = scmp.eq.s32.totalorder %s25, 0
      %p198 = por %p196, %p197
      %p199 = scmp.ne.s32.totalorder %s187, %s188
      %p200 = scmp.eq.s32.totalorder %s26, 1
      %p201 = por %p199, %p200
      %p203 = scmp.ne.s32.totalorder %s188, %s202
      %p204 = scmp.eq.s32.totalorder %s26, 0
      %p205 = por %p203, %p204
      %s207 = sadd.s32 %s206, 1
      %p210 = scmp.eq.s32.totalorder %s20, 1
      %p211 = scmp.ne.s32.totalorder %s206, %s208
      %p212 = scmp.eq.s32.totalorder %s20, 0
      %p213 = por %p211, %p212
      %p214 = scmp.ne.s32.totalorder %s206, %s208
      %p215 = scmp.eq.s32.totalorder %s25, 1
      %p216 = por %p214, %p215
      %p217 = scmp.ne.s32.totalorder %s208, %s209
      %p218 = scmp.eq.s32.totalorder %s25, 0
      %p219 = por %p217, %p218
      %p220 = scmp.ne.s32.totalorder %s208, %s209
      %p221 = scmp.eq.s32.totalorder %s26, 1
      %p222 = por %p220, %p221
      %p224 = scmp.ne.s32.totalorder %s209, %s223
      %p225 = scmp.eq.s32.totalorder %s26, 0
      %p226 = por %p224, %p225
      %s227 = ssub.s32 %s20, %s27
      %p228 = scmp.eq.s32.totalorder %s227, 0
      %s230 = sadd.s32 %s229, 1
      %s231 = scalar_select %p228, %s229, %s230
      %p234 = pneg %p228
      %p235 = scmp.eq.s32.totalorder %s20, 1
      %p236 = por %p234, %p235
      %p237 = scmp.ne.s32.totalorder %s229, %s232
      %p238 = scmp.eq.s32.totalorder %s20, 0
      %p239 = por %p237, %p238
      %p240 = scmp.ne.s32.totalorder %s229, %s232
      %p241 = scmp.eq.s32.totalorder %s25, 1
      %p242 = por %p240, %p241
      %p243 = scmp.ne.s32.totalorder %s232, %s233
      %p244 = scmp.eq.s32.totalorder %s25, 0
      %p245 = por %p243, %p244
      %p246 = scmp.ne.s32.totalorder %s232, %s233
      %p247 = scmp.eq.s32.totalorder %s26, 1
      %p248 = por %p246, %p247
      %p250 = scmp.ne.s32.totalorder %s233, %s249
      %p251 = scmp.eq.s32.totalorder %s26, 0
      %p252 = por %p250, %p251
      %p253 = scmp.le.s32.totalorder 1, %s20
      %p254 = scmp.lt.s32.totalorder %s20, 3
      %p255 = pnand %p253, %p254
      %p256 = pneg %p255
      // Predicated region
      $region9: #{tpu_custom_call.1} parent=5 // pred_check
        _
      $region10: #{tpu_custom_call.1} parent=5 // pred_check_branch
        %258 = sbr.rel (%p255) target = $region12
      $region11: #{tpu_custom_call.1} parent=5 // pred_region
        %s259 = ssub.s32 %s20, 1
        // Predicated region
        $region13: #{tpu_custom_call.1} parent=11 // pred_check
          %p260 = pneg %p93
        $region14: #{tpu_custom_call.1} parent=11 // pred_check_branch
          %262 = sbr.rel (%p260) target = $region16
        $region15: #{tpu_custom_call.1} parent=11 // pred_region
          _
        $region16: #{tpu_custom_call.1} parent=11 // pred_fallthru
          _
        // Predicated region
        $region17: #{tpu_custom_call.1} parent=11 // pred_check
          %p263 = pneg %p114
        $region18: #{tpu_custom_call.1} parent=11 // pred_check_branch
          %265 = sbr.rel (%p263) target = $region20
        $region19: #{tpu_custom_call.1} parent=11 // pred_region
          _
        $region20: #{tpu_custom_call.1} parent=11 // pred_fallthru
          _
        // Predicated region
        $region21: #{tpu_custom_call.1} parent=11 // pred_check
          %p266 = pneg %p135
        $region22: #{tpu_custom_call.1} parent=11 // pred_check_branch
          %268 = sbr.rel (%p266) target = $region24
        $region23: #{tpu_custom_call.1} parent=11 // pred_region
          _
        $region24: #{tpu_custom_call.1} parent=11 // pred_fallthru
          _
        // Predicated region
        $region25: #{tpu_custom_call.1} parent=11 // pred_check
          %p269 = pneg %p156
        $region26: #{tpu_custom_call.1} parent=11 // pred_check_branch
          %271 = sbr.rel (%p269) target = $region28
        $region27: #{tpu_custom_call.1} parent=11 // pred_region
          _
        $region28: #{tpu_custom_call.1} parent=11 // pred_fallthru
          _
        // Predicated region
        $region29: #{tpu_custom_call.1} parent=11 // pred_check
          %p272 = pneg %p177
        $region30: #{tpu_custom_call.1} parent=11 // pred_check_branch
          %274 = sbr.rel (%p272) target = $region32
        $region31: #{tpu_custom_call.1} parent=11 // pred_region
          _
        $region32: #{tpu_custom_call.1} parent=11 // pred_fallthru
          _
        // Predicated region
        $region33: #{tpu_custom_call.1} parent=11 // pred_check
          %p275 = pneg %p198
        $region34: #{tpu_custom_call.1} parent=11 // pred_check_branch
          %277 = sbr.rel (%p275) target = $region36
        $region35: #{tpu_custom_call.1} parent=11 // pred_region
          _
        $region36: #{tpu_custom_call.1} parent=11 // pred_fallthru
          _
        // Predicated region
        $region37: #{tpu_custom_call.1} parent=11 // pred_check
          %p278 = pneg %p219
        $region38: #{tpu_custom_call.1} parent=11 // pred_check_branch
          %280 = sbr.rel (%p278) target = $region40
        $region39: #{tpu_custom_call.1} parent=11 // pred_region
          _
        $region40: #{tpu_custom_call.1} parent=11 // pred_fallthru
          _
      $region12: #{tpu_custom_call.1} parent=5 // pred_fallthru
        _
      %p281 = scmp.lt.s32.totalorder %s20, 2
      // Predicated region
      $region41: #{tpu_custom_call.1} parent=5 // pred_check
        %p282 = pneg %p281
      $region42: #{tpu_custom_call.1} parent=5 // pred_check_branch
        %284 = sbr.rel (%p282) target = $region44
      $region43: #{tpu_custom_call.1} parent=5 // pred_region
        // Predicated region
        $region45: #{tpu_custom_call.1} parent=43 // pred_check
          %p285 = pneg %p40
        $region46: #{tpu_custom_call.1} parent=43 // pred_check_branch
          %287 = sbr.rel (%p285) target = $region48
        $region47: #{tpu_custom_call.1} parent=43 // pred_region
          %s288 = smul.u32 32, %s20
          %p289 = scmp.lt.s32.totalorder %s288, 63
          %s290 = scalar_select %p289, %s288, 63
          %s291 = smul.addr %s290, 8
          %s292 = scalar_lea.vmem %s0, %s291
          %s293 = smul.u32 32, %s20
        $region48: #{tpu_custom_call.1} parent=43 // pred_fallthru
          _
        // Predicated region
        $region49: #{tpu_custom_call.1} parent=43 // pred_check
          %p294 = pneg %p66
        $region50: #{tpu_custom_call.1} parent=43 // pred_check_branch
          %296 = sbr.rel (%p294) target = $region52
        $region51: #{tpu_custom_call.1} parent=43 // pred_region
          %s297 = smul.u32 32, %s20
          %p298 = scmp.lt.s32.totalorder %s297, 63
          %s299 = scalar_select %p298, %s297, 63
          %s300 = smul.addr %s299, 8
          %s301 = scalar_lea.vmem %s1, %s300
          %s302 = smul.u32 32, %s20
        $region52: #{tpu_custom_call.1} parent=43 // pred_fallthru
          _
      $region44: #{tpu_custom_call.1} parent=5 // pred_fallthru
        _
      %p303 = scmp.le.s32.totalorder 1, %s20
      %p304 = scmp.lt.s32.totalorder %s20, 3
      %p305 = pnand %p303, %p304
      %p306 = pneg %p305
      // Predicated region
      $region53: #{tpu_custom_call.1} parent=5 // pred_check
        _
      $region54: #{tpu_custom_call.1} parent=5 // pred_check_branch
        %308 = sbr.rel (%p305) target = $region56
      $region55: #{tpu_custom_call.1} parent=5 // pred_region
        %s309 = ssub.s32 %s20, 1
        %s310 = smul.u32 32, %s25
        %p311 = scmp.lt.s32.totalorder %s310, 63
        %s312 = scalar_select %p311, %s310, 63
        %s313 = smul.addr %s312, 8
        %s314 = scalar_lea.vmem %s0, %s313
        %p315 = pneg %p46
        %p316 = pneg %p43
        %s317 = smul.u32 32, %s25
        %p318 = scmp.lt.s32.totalorder %s317, 63
        %s319 = scalar_select %p318, %s317, 63
        %s320 = smul.addr %s319, 8
        %s321 = scalar_lea.vmem %s1, %s320
        %p322 = pneg %p72
        %p323 = pneg %p69
        %p324 = pneg %p93
        %p325 = pneg %p90
        %p326 = pneg %p114
        %p327 = pneg %p111
        %p328 = pneg %p135
        %p329 = pneg %p132
        %p330 = pneg %p156
        %p331 = pneg %p153
        %p332 = pneg %p177
        %p333 = pneg %p174
        %p334 = pneg %p198
        %p335 = pneg %p195
        %p336 = pneg %p219
        %p337 = pneg %p216
        %p338 = pneg %p245
        %p339 = pneg %p242
        %s340 = sand.u32 %s232, 1
        %s341 = scalar_lea.sflag [#allocation4], %s340
        %s342 = sand.u32 %s232, 1
        %s343 = smul.addr %s342, 2
        %s344 = scalar_lea.vmem [#allocation3], %s343
        %s345 = smul.u32 32, %s25
        %p346 = scmp.lt.s32.totalorder %s345, 63
        %s347 = scalar_select %p346, %s345, 63
        %s348 = smul.addr %s347, 8
        %s349 = scalar_lea.vmem %s0, %s348
        %s350 = smul.u32 32, %s25
        %s351 = smul.u32 32, %s25
        %p352 = scmp.lt.s32.totalorder %s351, 63
        %s353 = scalar_select %p352, %s351, 63
        %s354 = smul.addr %s353, 8
        %s355 = scalar_lea.vmem %s1, %s354
        %s356 = smul.u32 32, %s25
        %s357 = smul.u32 2, %s25
        %v358 = vld [vmem:[%s349] sm:$0xff]
        %v359 = vld [vmem:[%s349 + $0x8] sm:$0xff]
        %v360 = vld [vmem:[%s349 + $0x10] sm:$0xff]
        %v361 = vld [vmem:[%s349 + $0x18] sm:$0xff]
        %v362 = vld [vmem:[%s349 + $0x20] sm:$0xff]
        %v363 = vld [vmem:[%s349 + $0x28] sm:$0xff]
        %v364 = vld [vmem:[%s349 + $0x30] sm:$0xff]
        %v365 = vld [vmem:[%s349 + $0x38] sm:$0xff]
        %v366 = vld [vmem:[%s349 + $0x40] sm:$0xff]
        %v367 = vld [vmem:[%s349 + $0x48] sm:$0xff]
        %v368 = vld [vmem:[%s349 + $0x50] sm:$0xff]
        %v369 = vld [vmem:[%s349 + $0x58] sm:$0xff]
        %v370 = vld [vmem:[%s349 + $0x60] sm:$0xff]
        %v371 = vld [vmem:[%s349 + $0x68] sm:$0xff]
        %v372 = vld [vmem:[%s349 + $0x70] sm:$0xff]
        %v373 = vld [vmem:[%s349 + $0x78] sm:$0xff]
        %v374 = vld [vmem:[%s349 + $0x80] sm:$0xff]
        %v375 = vld [vmem:[%s349 + $0x88] sm:$0xff]
        %v376 = vld [vmem:[%s349 + $0x90] sm:$0xff]
        %v377 = vld [vmem:[%s349 + $0x98] sm:$0xff]
        %v378 = vld [vmem:[%s349 + $0xa0] sm:$0xff]
        %v379 = vld [vmem:[%s349 + $0xa8] sm:$0xff]
        %v380 = vld [vmem:[%s349 + $0xb0] sm:$0xff]
        %v381 = vld [vmem:[%s349 + $0xb8] sm:$0xff]
        %v382 = vld [vmem:[%s349 + $0xc0] sm:$0xff]
        %v383 = vld [vmem:[%s349 + $0xc8] sm:$0xff]
        %v384 = vld [vmem:[%s349 + $0xd0] sm:$0xff]
        %v385 = vld [vmem:[%s349 + $0xd8] sm:$0xff]
        %v386 = vld [vmem:[%s349 + $0xe0] sm:$0xff]
        %v387 = vld [vmem:[%s349 + $0xe8] sm:$0xff]
        %v388 = vld [vmem:[%s349 + $0xf0] sm:$0xff]
        %v389 = vld [vmem:[%s349 + $0xf8] sm:$0xff]
        %v390 = vpack.c.bf16 %v359, %v358
        %v391 = vpack.c.bf16 %v361, %v360
        %v392 = vpack.c.bf16 %v363, %v362
        %v393 = vpack.c.bf16 %v365, %v364
        %v394 = vpack.c.bf16 %v367, %v366
        %v395 = vpack.c.bf16 %v369, %v368
        %v396 = vpack.c.bf16 %v371, %v370
        %v397 = vpack.c.bf16 %v373, %v372
        %v398 = vpack.c.bf16 %v375, %v374
        %v399 = vpack.c.bf16 %v377, %v376
        %v400 = vpack.c.bf16 %v379, %v378
        %v401 = vpack.c.bf16 %v381, %v380
        %v402 = vpack.c.bf16 %v383, %v382
        %v403 = vpack.c.bf16 %v385, %v384
        %v404 = vpack.c.bf16 %v387, %v386
        %v405 = vpack.c.bf16 %v389, %v388
        %v406 = vld [vmem:[%s355] sm:$0xff]
        %v407 = vld [vmem:[%s355 + $0x8] sm:$0xff]
        %v408 = vld [vmem:[%s355 + $0x10] sm:$0xff]
        %v409 = vld [vmem:[%s355 + $0x18] sm:$0xff]
        %v410 = vld [vmem:[%s355 + $0x20] sm:$0xff]
        %v411 = vld [vmem:[%s355 + $0x28] sm:$0xff]
        %v412 = vld [vmem:[%s355 + $0x30] sm:$0xff]
        %v413 = vld [vmem:[%s355 + $0x38] sm:$0xff]
        %v414 = vld [vmem:[%s355 + $0x40] sm:$0xff]
        %v415 = vld [vmem:[%s355 + $0x48] sm:$0xff]
        %v416 = vld [vmem:[%s355 + $0x50] sm:$0xff]
        %v417 = vld [vmem:[%s355 + $0x58] sm:$0xff]
        %v418 = vld [vmem:[%s355 + $0x60] sm:$0xff]
        %v419 = vld [vmem:[%s355 + $0x68] sm:$0xff]
        %v420 = vld [vmem:[%s355 + $0x70] sm:$0xff]
        %v421 = vld [vmem:[%s355 + $0x78] sm:$0xff]
        %v422 = vld [vmem:[%s355 + $0x80] sm:$0xff]
        %v423 = vld [vmem:[%s355 + $0x88] sm:$0xff]
        %v424 = vld [vmem:[%s355 + $0x90] sm:$0xff]
        %v425 = vld [vmem:[%s355 + $0x98] sm:$0xff]
        %v426 = vld [vmem:[%s355 + $0xa0] sm:$0xff]
        %v427 = vld [vmem:[%s355 + $0xa8] sm:$0xff]
        %v428 = vld [vmem:[%s355 + $0xb0] sm:$0xff]
        %v429 = vld [vmem:[%s355 + $0xb8] sm:$0xff]
        %v430 = vld [vmem:[%s355 + $0xc0] sm:$0xff]
        %v431 = vld [vmem:[%s355 + $0xc8] sm:$0xff]
        %v432 = vld [vmem:[%s355 + $0xd0] sm:$0xff]
        %v433 = vld [vmem:[%s355 + $0xd8] sm:$0xff]
        %v434 = vld [vmem:[%s355 + $0xe0] sm:$0xff]
        %v435 = vld [vmem:[%s355 + $0xe8] sm:$0xff]
        %v436 = vld [vmem:[%s355 + $0xf0] sm:$0xff]
        %v437 = vld [vmem:[%s355 + $0xf8] sm:$0xff]
        %v438 = vpack.c.bf16 %v407, %v406
        %v439 = vpack.c.bf16 %v409, %v408
        %v440 = vpack.c.bf16 %v411, %v410
        %v441 = vpack.c.bf16 %v413, %v412
        %v442 = vpack.c.bf16 %v415, %v414
        %v443 = vpack.c.bf16 %v417, %v416
        %v444 = vpack.c.bf16 %v419, %v418
        %v445 = vpack.c.bf16 %v421, %v420
        %v446 = vpack.c.bf16 %v423, %v422
        %v447 = vpack.c.bf16 %v425, %v424
        %v448 = vpack.c.bf16 %v427, %v426
        %v449 = vpack.c.bf16 %v429, %v428
        %v450 = vpack.c.bf16 %v431, %v430
        %v451 = vpack.c.bf16 %v433, %v432
        %v452 = vpack.c.bf16 %v435, %v434
        %v453 = vpack.c.bf16 %v437, %v436
        %v454 = vld [vmem:[%s2] sm:$0xf]
        %v455 = vld [vmem:[%s2 + $0x4] sm:$0xf]
        %v456 = vld [vmem:[%s2 + $0x8] sm:$0xf]
        %v457 = vld [vmem:[%s2 + $0xc] sm:$0xf]
        %v458 = vld [vmem:[%s2 + $0x10] sm:$0xf]
        %v459 = vld [vmem:[%s2 + $0x14] sm:$0xf]
        %v460 = vld [vmem:[%s2 + $0x18] sm:$0xf]
        %v461 = vld [vmem:[%s2 + $0x1c] sm:$0xf]
        %v462 = vld [vmem:[%s2 + $0x20] sm:$0xf]
        %v463 = vld [vmem:[%s2 + $0x24] sm:$0xf]
        %v464 = vld [vmem:[%s2 + $0x28] sm:$0xf]
        %v465 = vld [vmem:[%s2 + $0x2c] sm:$0xf]
        %v466 = vld [vmem:[%s2 + $0x30] sm:$0xf]
        %v467 = vld [vmem:[%s2 + $0x34] sm:$0xf]
        %v468 = vld [vmem:[%s2 + $0x38] sm:$0xf]
        %v469 = vld [vmem:[%s2 + $0x3c] sm:$0xf]
        %v470 = vld [vmem:[%s3] sm:$0xf]
        %v471 = vld [vmem:[%s3 + $0x4] sm:$0xf]
        %v472 = vld [vmem:[%s3 + $0x8] sm:$0xf]
        %v473 = vld [vmem:[%s3 + $0xc] sm:$0xf]
        %v474 = vld [vmem:[%s3 + $0x10] sm:$0xf]
        %v475 = vld [vmem:[%s3 + $0x14] sm:$0xf]
        %v476 = vld [vmem:[%s3 + $0x18] sm:$0xf]
        %v477 = vld [vmem:[%s3 + $0x1c] sm:$0xf]
        %v478 = vld [vmem:[%s3 + $0x20] sm:$0xf]
        %v479 = vld [vmem:[%s3 + $0x24] sm:$0xf]
        %v480 = vld [vmem:[%s3 + $0x28] sm:$0xf]
        %v481 = vld [vmem:[%s3 + $0x2c] sm:$0xf]
        %v482 = vld [vmem:[%s3 + $0x30] sm:$0xf]
        %v483 = vld [vmem:[%s3 + $0x34] sm:$0xf]
        %v484 = vld [vmem:[%s3 + $0x38] sm:$0xf]
        %v485 = vld [vmem:[%s3 + $0x3c] sm:$0xf]
        %v502 = vunpack.c.l.b16 %v470
        %v503 = vunpack.c.l.b16 %v471
        %v504 = vunpack.c.l.b16 %v472
        %v505 = vunpack.c.l.b16 %v473
        %v506 = vunpack.c.l.b16 %v474
        %v507 = vunpack.c.l.b16 %v475
        %v508 = vunpack.c.l.b16 %v476
        %v509 = vunpack.c.l.b16 %v477
        %v510 = vunpack.c.l.b16 %v478
        %v511 = vunpack.c.l.b16 %v479
        %v512 = vunpack.c.l.b16 %v480
        %v513 = vunpack.c.l.b16 %v481
        %v514 = vunpack.c.l.b16 %v482
        %v515 = vunpack.c.l.b16 %v483
        %v516 = vunpack.c.l.b16 %v484
        %v517 = vunpack.c.l.b16 %v485
        %v518 = vpack.c.b16 %v503, %v502
        %v519 = vpack.c.b16 %v505, %v504
        %v520 = vpack.c.b16 %v507, %v506
        %v521 = vpack.c.b16 %v509, %v508
        %v522 = vpack.c.b16 %v511, %v510
        %v523 = vpack.c.b16 %v513, %v512
        %v524 = vpack.c.b16 %v515, %v514
        %v525 = vpack.c.b16 %v517, %v516
        %vm526 = vcmask 31744
        %v528 = vsel %vm526, %v518, 0
        %v531 = vsel %vm526, %v519, 0
        %v534 = vsel %vm526, %v520, 0
        %v537 = vsel %vm526, %v521, 0
        %v540 = vsel %vm526, %v522, 0
        %v543 = vsel %vm526, %v523, 0
        %v546 = vsel %vm526, %v524, 0
        %v549 = vsel %vm526, %v525, 0
        %v552 = vsel %vm526, %v438, 0
        %v555 = vsel %vm526, %v439, 0
        %v558 = vsel %vm526, %v440, 0
        %v561 = vsel %vm526, %v441, 0
        %v564 = vsel %vm526, %v442, 0
        %v567 = vsel %vm526, %v443, 0
        %v570 = vsel %vm526, %v444, 0
        %v573 = vsel %vm526, %v445, 0
        %v576 = vsel %vm526, %v446, 0
        %v579 = vsel %vm526, %v447, 0
        %v582 = vsel %vm526, %v448, 0
        %v585 = vsel %vm526, %v449, 0
        %v588 = vsel %vm526, %v450, 0
        %v591 = vsel %vm526, %v451, 0
        %v594 = vsel %vm526, %v452, 0
        %v597 = vsel %vm526, %v453, 0
        %599 = vmatpush.bf16.xpose.msra.mxu0 %v573
        %600 = vmatpush.bf16.xpose.msra.mxu0 %v570
        %601 = vmatpush.bf16.xpose.msra.mxu0 %v567
        %602 = vmatpush.bf16.xpose.msra.mxu0 %v564
        %603 = vmatpush.bf16.xpose.msra.mxu0 %v561
        %604 = vmatpush.bf16.xpose.msra.mxu0 %v558
        %605 = vmatpush.bf16.xpose.msra.mxu0 %v555
        %606 = vmatpush.bf16.xpose.msra.mxu0 %v552
        %607 = vmatmul.bf16.gmra.mxu0 %v528
        %v608 = vpop.f32.mrf.mxu0
        %v609 = vadd.f32 0.0, %v608
        %v610 = vpop.f32.mrf.mxu0
        %v611 = vadd.f32 0.0, %v610
        %612 = vmatmul.bf16.gmra.mxu0 %v531
        %v613 = vpop.f32.mrf.mxu0
        %v614 = vadd.f32 0.0, %v613
        %v615 = vpop.f32.mrf.mxu0
        %v616 = vadd.f32 0.0, %v615
        %617 = vmatmul.bf16.gmra.mxu0 %v534
        %v618 = vpop.f32.mrf.mxu0
        %v619 = vadd.f32 0.0, %v618
        %v620 = vpop.f32.mrf.mxu0
        %v621 = vadd.f32 0.0, %v620
        %622 = vmatmul.bf16.gmra.mxu0 %v537
        %v623 = vpop.f32.mrf.mxu0
        %v624 = vadd.f32 0.0, %v623
        %v625 = vpop.f32.mrf.mxu0
        %v626 = vadd.f32 0.0, %v625
        %627 = vmatmul.bf16.gmra.mxu0 %v540
        %v628 = vpop.f32.mrf.mxu0
        %v629 = vadd.f32 0.0, %v628
        %v630 = vpop.f32.mrf.mxu0
        %v631 = vadd.f32 0.0, %v630
        %632 = vmatmul.bf16.gmra.mxu0 %v543
        %v633 = vpop.f32.mrf.mxu0
        %v634 = vadd.f32 0.0, %v633
        %v635 = vpop.f32.mrf.mxu0
        %v636 = vadd.f32 0.0, %v635
        %637 = vmatmul.bf16.gmra.mxu0 %v546
        %v638 = vpop.f32.mrf.mxu0
        %v639 = vadd.f32 0.0, %v638
        %v640 = vpop.f32.mrf.mxu0
        %v641 = vadd.f32 0.0, %v640
        %642 = vmatmul.bf16.gmra.mxu0 %v549
        %v643 = vpop.f32.mrf.mxu0
        %v644 = vadd.f32 0.0, %v643
        %v645 = vpop.f32.mrf.mxu0
        %v646 = vadd.f32 0.0, %v645
        %647 = vdwg.mxu0
        %648 = vmatpush.bf16.xpose.msra.mxu0 %v597
        %649 = vmatpush.bf16.xpose.msra.mxu0 %v594
        %650 = vmatpush.bf16.xpose.msra.mxu0 %v591
        %651 = vmatpush.bf16.xpose.msra.mxu0 %v588
        %652 = vmatpush.bf16.xpose.msra.mxu0 %v585
        %653 = vmatpush.bf16.xpose.msra.mxu0 %v582
        %654 = vmatpush.bf16.xpose.msra.mxu0 %v579
        %655 = vmatpush.bf16.xpose.msra.mxu0 %v576
        %656 = vmatmul.bf16.gmra.mxu0 %v528
        %v657 = vpop.f32.mrf.mxu0
        %v658 = vadd.f32 0.0, %v657
        %v659 = vpop.f32.mrf.mxu0
        %v660 = vadd.f32 0.0, %v659
        %661 = vmatmul.bf16.gmra.mxu0 %v531
        %v662 = vpop.f32.mrf.mxu0
        %v663 = vadd.f32 0.0, %v662
        %v664 = vpop.f32.mrf.mxu0
        %v665 = vadd.f32 0.0, %v664
        %666 = vmatmul.bf16.gmra.mxu0 %v534
        %v667 = vpop.f32.mrf.mxu0
        %v668 = vadd.f32 0.0, %v667
        %v669 = vpop.f32.mrf.mxu0
        %v670 = vadd.f32 0.0, %v669
        %671 = vmatmul.bf16.gmra.mxu0 %v537
        %v672 = vpop.f32.mrf.mxu0
        %v673 = vadd.f32 0.0, %v672
        %v674 = vpop.f32.mrf.mxu0
        %v675 = vadd.f32 0.0, %v674
        %676 = vmatmul.bf16.gmra.mxu0 %v540
        %v677 = vpop.f32.mrf.mxu0
        %v678 = vadd.f32 0.0, %v677
        %v679 = vpop.f32.mrf.mxu0
        %v680 = vadd.f32 0.0, %v679
        %681 = vmatmul.bf16.gmra.mxu0 %v543
        %v682 = vpop.f32.mrf.mxu0
        %v683 = vadd.f32 0.0, %v682
        %v684 = vpop.f32.mrf.mxu0
        %v685 = vadd.f32 0.0, %v684
        %686 = vmatmul.bf16.gmra.mxu0 %v546
        %v687 = vpop.f32.mrf.mxu0
        %v688 = vadd.f32 0.0, %v687
        %v689 = vpop.f32.mrf.mxu0
        %v690 = vadd.f32 0.0, %v689
        %691 = vmatmul.bf16.gmra.mxu0 %v549
        %v692 = vpop.f32.mrf.mxu0
        %v693 = vadd.f32 0.0, %v692
        %v694 = vpop.f32.mrf.mxu0
        %v695 = vadd.f32 0.0, %v694
        %696 = vdwg.mxu0
        %v713 = vunpack.c.l.b16 %v454
        %v714 = vunpack.c.l.b16 %v455
        %v715 = vunpack.c.l.b16 %v456
        %v716 = vunpack.c.l.b16 %v457
        %v717 = vunpack.c.l.b16 %v458
        %v718 = vunpack.c.l.b16 %v459
        %v719 = vunpack.c.l.b16 %v460
        %v720 = vunpack.c.l.b16 %v461
        %v721 = vunpack.c.l.b16 %v462
        %v722 = vunpack.c.l.b16 %v463
        %v723 = vunpack.c.l.b16 %v464
        %v724 = vunpack.c.l.b16 %v465
        %v725 = vunpack.c.l.b16 %v466
        %v726 = vunpack.c.l.b16 %v467
        %v727 = vunpack.c.l.b16 %v468
        %v728 = vunpack.c.l.b16 %v469
        %v729 = vpack.c.b16 %v714, %v713
        %v730 = vpack.c.b16 %v716, %v715
        %v731 = vpack.c.b16 %v718, %v717
        %v732 = vpack.c.b16 %v720, %v719
        %v733 = vpack.c.b16 %v722, %v721
        %v734 = vpack.c.b16 %v724, %v723
        %v735 = vpack.c.b16 %v726, %v725
        %v736 = vpack.c.b16 %v728, %v727
        %vm737 = vcmask 195584
        %v739 = vsel %vm737, %v729, 0
        %v742 = vsel %vm737, %v730, 0
        %v745 = vsel %vm737, %v731, 0
        %v748 = vsel %vm737, %v732, 0
        %v751 = vsel %vm737, %v733, 0
        %v754 = vsel %vm737, %v734, 0
        %v757 = vsel %vm737, %v735, 0
        %v760 = vsel %vm737, %v736, 0
        %v763 = vsel %vm737, %v390, 0
        %v766 = vsel %vm737, %v391, 0
        %v769 = vsel %vm737, %v392, 0
        %v772 = vsel %vm737, %v393, 0
        %v775 = vsel %vm737, %v394, 0
        %v778 = vsel %vm737, %v395, 0
        %v781 = vsel %vm737, %v396, 0
        %v784 = vsel %vm737, %v397, 0
        %v787 = vsel %vm737, %v398, 0
        %v790 = vsel %vm737, %v399, 0
        %v793 = vsel %vm737, %v400, 0
        %v796 = vsel %vm737, %v401, 0
        %v799 = vsel %vm737, %v402, 0
        %v802 = vsel %vm737, %v403, 0
        %v805 = vsel %vm737, %v404, 0
        %v808 = vsel %vm737, %v405, 0
        %810 = vmatpush.bf16.xpose.msra.mxu0 %v784
        %811 = vmatpush.bf16.xpose.msra.mxu0 %v781
        %812 = vmatpush.bf16.xpose.msra.mxu0 %v778
        %813 = vmatpush.bf16.xpose.msra.mxu0 %v775
        %814 = vmatpush.bf16.xpose.msra.mxu0 %v772
        %815 = vmatpush.bf16.xpose.msra.mxu0 %v769
        %816 = vmatpush.bf16.xpose.msra.mxu0 %v766
        %817 = vmatpush.bf16.xpose.msra.mxu0 %v763
        %818 = vmatmul.bf16.gmra.mxu0 %v739
        %v819 = vpop.f32.mrf.mxu0
        %v820 = vadd.f32 %v609, %v819
        %v821 = vpop.f32.mrf.mxu0
        %v822 = vadd.f32 %v611, %v821
        %823 = vmatmul.bf16.gmra.mxu0 %v742
        %v824 = vpop.f32.mrf.mxu0
        %v825 = vadd.f32 %v614, %v824
        %v826 = vpop.f32.mrf.mxu0
        %v827 = vadd.f32 %v616, %v826
        %828 = vmatmul.bf16.gmra.mxu0 %v745
        %v829 = vpop.f32.mrf.mxu0
        %v830 = vadd.f32 %v619, %v829
        %v831 = vpop.f32.mrf.mxu0
        %v832 = vadd.f32 %v621, %v831
        %833 = vmatmul.bf16.gmra.mxu0 %v748
        %v834 = vpop.f32.mrf.mxu0
        %v835 = vadd.f32 %v624, %v834
        %v836 = vpop.f32.mrf.mxu0
        %v837 = vadd.f32 %v626, %v836
        %838 = vmatmul.bf16.gmra.mxu0 %v751
        %v839 = vpop.f32.mrf.mxu0
        %v840 = vadd.f32 %v629, %v839
        %v841 = vpop.f32.mrf.mxu0
        %v842 = vadd.f32 %v631, %v841
        %843 = vmatmul.bf16.gmra.mxu0 %v754
        %v844 = vpop.f32.mrf.mxu0
        %v845 = vadd.f32 %v634, %v844
        %v846 = vpop.f32.mrf.mxu0
        %v847 = vadd.f32 %v636, %v846
        %848 = vmatmul.bf16.gmra.mxu0 %v757
        %v849 = vpop.f32.mrf.mxu0
        %v850 = vadd.f32 %v639, %v849
        %v851 = vpop.f32.mrf.mxu0
        %v852 = vadd.f32 %v641, %v851
        %853 = vmatmul.bf16.gmra.mxu0 %v760
        %v854 = vpop.f32.mrf.mxu0
        %v855 = vadd.f32 %v644, %v854
        %v856 = vpop.f32.mrf.mxu0
        %v857 = vadd.f32 %v646, %v856
        %858 = vdwg.mxu0
        %859 = vmatpush.bf16.xpose.msra.mxu0 %v808
        %860 = vmatpush.bf16.xpose.msra.mxu0 %v805
        %861 = vmatpush.bf16.xpose.msra.mxu0 %v802
        %862 = vmatpush.bf16.xpose.msra.mxu0 %v799
        %863 = vmatpush.bf16.xpose.msra.mxu0 %v796
        %864 = vmatpush.bf16.xpose.msra.mxu0 %v793
        %865 = vmatpush.bf16.xpose.msra.mxu0 %v790
        %866 = vmatpush.bf16.xpose.msra.mxu0 %v787
        %867 = vmatmul.bf16.gmra.mxu0 %v739
        %v868 = vpop.f32.mrf.mxu0
        %v869 = vadd.f32 %v658, %v868
        %v870 = vpop.f32.mrf.mxu0
        %v871 = vadd.f32 %v660, %v870
        %872 = vmatmul.bf16.gmra.mxu0 %v742
        %v873 = vpop.f32.mrf.mxu0
        %v874 = vadd.f32 %v663, %v873
        %v875 = vpop.f32.mrf.mxu0
        %v876 = vadd.f32 %v665, %v875
        %877 = vmatmul.bf16.gmra.mxu0 %v745
        %v878 = vpop.f32.mrf.mxu0
        %v879 = vadd.f32 %v668, %v878
        %v880 = vpop.f32.mrf.mxu0
        %v881 = vadd.f32 %v670, %v880
        %882 = vmatmul.bf16.gmra.mxu0 %v748
        %v883 = vpop.f32.mrf.mxu0
        %v884 = vadd.f32 %v673, %v883
        %v885 = vpop.f32.mrf.mxu0
        %v886 = vadd.f32 %v675, %v885
        %887 = vmatmul.bf16.gmra.mxu0 %v751
        %v888 = vpop.f32.mrf.mxu0
        %v889 = vadd.f32 %v678, %v888
        %v890 = vpop.f32.mrf.mxu0
        %v891 = vadd.f32 %v680, %v890
        %892 = vmatmul.bf16.gmra.mxu0 %v754
        %v893 = vpop.f32.mrf.mxu0
        %v894 = vadd.f32 %v683, %v893
        %v895 = vpop.f32.mrf.mxu0
        %v896 = vadd.f32 %v685, %v895
        %897 = vmatmul.bf16.gmra.mxu0 %v757
        %v898 = vpop.f32.mrf.mxu0
        %v899 = vadd.f32 %v688, %v898
        %v900 = vpop.f32.mrf.mxu0
        %v901 = vadd.f32 %v690, %v900
        %902 = vmatmul.bf16.gmra.mxu0 %v760
        %v903 = vpop.f32.mrf.mxu0
        %v904 = vadd.f32 %v693, %v903
        %v905 = vpop.f32.mrf.mxu0
        %v906 = vadd.f32 %v695, %v905
        %907 = vdwg.mxu0
        %v908 = vld [vmem:[%s4] sm:$0xff]
        %v909 = vld [vmem:[%s4 + $0x8] sm:$0xff]
        %v910 = vld [vmem:[%s4 + $0x10] sm:$0xff]
        %v911 = vld [vmem:[%s4 + $0x18] sm:$0xff]
        %v912 = vld [vmem:[%s4 + $0x20] sm:$0xff]
        %v913 = vld [vmem:[%s4 + $0x28] sm:$0xff]
        %v914 = vld [vmem:[%s4 + $0x30] sm:$0xff]
        %v915 = vld [vmem:[%s4 + $0x38] sm:$0xff]
        %v916 = vld [vmem:[%s4 + $0x40] sm:$0xff]
        %v917 = vld [vmem:[%s4 + $0x48] sm:$0xff]
        %v918 = vld [vmem:[%s4 + $0x50] sm:$0xff]
        %v919 = vld [vmem:[%s4 + $0x58] sm:$0xff]
        %v920 = vld [vmem:[%s4 + $0x60] sm:$0xff]
        %v921 = vld [vmem:[%s4 + $0x68] sm:$0xff]
        %v922 = vld [vmem:[%s4 + $0x70] sm:$0xff]
        %v923 = vld [vmem:[%s4 + $0x78] sm:$0xff]
        %925 = vset.pattern.permute.xlu0 0
        %926 = vperm.xlu0 %925, %v908
        %v927 = vpop.permute.xlu0 %926
        %930 = vset.pattern.permute.xlu0 0
        %931 = vperm.xlu0 %930, %v909
        %v932 = vpop.permute.xlu0 %931
        %935 = vset.pattern.permute.xlu0 0
        %936 = vperm.xlu0 %935, %v910
        %v937 = vpop.permute.xlu0 %936
        %940 = vset.pattern.permute.xlu0 0
        %941 = vperm.xlu0 %940, %v911
        %v942 = vpop.permute.xlu0 %941
        %945 = vset.pattern.permute.xlu0 0
        %946 = vperm.xlu0 %945, %v912
        %v947 = vpop.permute.xlu0 %946
        %950 = vset.pattern.permute.xlu0 0
        %951 = vperm.xlu0 %950, %v913
        %v952 = vpop.permute.xlu0 %951
        %955 = vset.pattern.permute.xlu0 0
        %956 = vperm.xlu0 %955, %v914
        %v957 = vpop.permute.xlu0 %956
        %960 = vset.pattern.permute.xlu0 0
        %961 = vperm.xlu0 %960, %v915
        %v962 = vpop.permute.xlu0 %961
        %965 = vset.pattern.permute.xlu0 0
        %966 = vperm.xlu0 %965, %v916
        %v967 = vpop.permute.xlu0 %966
        %970 = vset.pattern.permute.xlu0 0
        %971 = vperm.xlu0 %970, %v917
        %v972 = vpop.permute.xlu0 %971
        %975 = vset.pattern.permute.xlu0 0
        %976 = vperm.xlu0 %975, %v918
        %v977 = vpop.permute.xlu0 %976
        %980 = vset.pattern.permute.xlu0 0
        %981 = vperm.xlu0 %980, %v919
        %v982 = vpop.permute.xlu0 %981
        %985 = vset.pattern.permute.xlu0 0
        %986 = vperm.xlu0 %985, %v920
        %v987 = vpop.permute.xlu0 %986
        %990 = vset.pattern.permute.xlu0 0
        %991 = vperm.xlu0 %990, %v921
        %v992 = vpop.permute.xlu0 %991
        %995 = vset.pattern.permute.xlu0 0
        %996 = vperm.xlu0 %995, %v922
        %v997 = vpop.permute.xlu0 %996
        %1000 = vset.pattern.permute.xlu0 0
        %1001 = vperm.xlu0 %1000, %v923
        %v1002 = vpop.permute.xlu0 %1001
        %v1004 = vadd.f32 %v820, %v927
        %v1005 = vadd.f32 %v869, %v927
        %v1006 = vadd.f32 %v822, %v932
        %v1007 = vadd.f32 %v871, %v932
        %v1008 = vadd.f32 %v825, %v937
        %v1009 = vadd.f32 %v874, %v937
        %v1010 = vadd.f32 %v827, %v942
        %v1011 = vadd.f32 %v876, %v942
        %v1012 = vadd.f32 %v830, %v947
        %v1013 = vadd.f32 %v879, %v947
        %v1014 = vadd.f32 %v832, %v952
        %v1015 = vadd.f32 %v881, %v952
        %v1016 = vadd.f32 %v835, %v957
        %v1017 = vadd.f32 %v884, %v957
        %v1018 = vadd.f32 %v837, %v962
        %v1019 = vadd.f32 %v886, %v962
        %v1020 = vadd.f32 %v840, %v967
        %v1021 = vadd.f32 %v889, %v967
        %v1022 = vadd.f32 %v842, %v972
        %v1023 = vadd.f32 %v891, %v972
        %v1024 = vadd.f32 %v845, %v977
        %v1025 = vadd.f32 %v894, %v977
        %v1026 = vadd.f32 %v847, %v982
        %v1027 = vadd.f32 %v896, %v982
        %v1028 = vadd.f32 %v850, %v987
        %v1029 = vadd.f32 %v899, %v987
        %v1030 = vadd.f32 %v852, %v992
        %v1031 = vadd.f32 %v901, %v992
        %v1032 = vadd.f32 %v855, %v997
        %v1033 = vadd.f32 %v904, %v997
        %v1034 = vadd.f32 %v857, %v1002
        %v1035 = vadd.f32 %v906, %v1002
        %v1036 = vmax.f32 %v1004, 0.0
        %v1037 = vmax.f32 %v1005, 0.0
        %v1038 = vmax.f32 %v1006, 0.0
        %v1039 = vmax.f32 %v1007, 0.0
        %v1040 = vmax.f32 %v1008, 0.0
        %v1041 = vmax.f32 %v1009, 0.0
        %v1042 = vmax.f32 %v1010, 0.0
        %v1043 = vmax.f32 %v1011, 0.0
        %v1044 = vmax.f32 %v1012, 0.0
        %v1045 = vmax.f32 %v1013, 0.0
        %v1046 = vmax.f32 %v1014, 0.0
        %v1047 = vmax.f32 %v1015, 0.0
        %v1048 = vmax.f32 %v1016, 0.0
        %v1049 = vmax.f32 %v1017, 0.0
        %v1050 = vmax.f32 %v1018, 0.0
        %v1051 = vmax.f32 %v1019, 0.0
        %v1052 = vmax.f32 %v1020, 0.0
        %v1053 = vmax.f32 %v1021, 0.0
        %v1054 = vmax.f32 %v1022, 0.0
        %v1055 = vmax.f32 %v1023, 0.0
        %v1056 = vmax.f32 %v1024, 0.0
        %v1057 = vmax.f32 %v1025, 0.0
        %v1058 = vmax.f32 %v1026, 0.0
        %v1059 = vmax.f32 %v1027, 0.0
        %v1060 = vmax.f32 %v1028, 0.0
        %v1061 = vmax.f32 %v1029, 0.0
        %v1062 = vmax.f32 %v1030, 0.0
        %v1063 = vmax.f32 %v1031, 0.0
        %v1064 = vmax.f32 %v1032, 0.0
        %v1065 = vmax.f32 %v1033, 0.0
        %v1066 = vmax.f32 %v1034, 0.0
        %v1067 = vmax.f32 %v1035, 0.0
        %v1068 = vld [vmem:[%s5] sm:$0xf]
        %v1069 = vld [vmem:[%s5 + $0x4] sm:$0xf]
        %v1070 = vld [vmem:[%s5 + $0x8] sm:$0xf]
        %v1071 = vld [vmem:[%s5 + $0xc] sm:$0xf]
        %v1072 = vld [vmem:[%s5 + $0x10] sm:$0xf]
        %v1073 = vld [vmem:[%s5 + $0x14] sm:$0xf]
        %v1074 = vld [vmem:[%s5 + $0x18] sm:$0xf]
        %v1075 = vld [vmem:[%s5 + $0x1c] sm:$0xf]
        %v1076 = vld [vmem:[%s5 + $0x20] sm:$0xf]
        %v1077 = vld [vmem:[%s5 + $0x24] sm:$0xf]
        %v1078 = vld [vmem:[%s5 + $0x28] sm:$0xf]
        %v1079 = vld [vmem:[%s5 + $0x2c] sm:$0xf]
        %v1080 = vld [vmem:[%s5 + $0x30] sm:$0xf]
        %v1081 = vld [vmem:[%s5 + $0x34] sm:$0xf]
        %v1082 = vld [vmem:[%s5 + $0x38] sm:$0xf]
        %v1083 = vld [vmem:[%s5 + $0x3c] sm:$0xf]
        %v1084 = vld [vmem:[%s6] sm:$0xff]
        %v1085 = vld [vmem:[%s6 + $0x8] sm:$0xff]
        %v1086 = vld [vmem:[%s6 + $0x10] sm:$0xff]
        %v1087 = vld [vmem:[%s6 + $0x18] sm:$0xff]
        %v1088 = vld [vmem:[%s6 + $0x20] sm:$0xff]
        %v1089 = vld [vmem:[%s6 + $0x28] sm:$0xff]
        %v1090 = vld [vmem:[%s6 + $0x30] sm:$0xff]
        %v1091 = vld [vmem:[%s6 + $0x38] sm:$0xff]
        %v1092 = vld [vmem:[%s6 + $0x40] sm:$0xff]
        %v1093 = vld [vmem:[%s6 + $0x48] sm:$0xff]
        %v1094 = vld [vmem:[%s6 + $0x50] sm:$0xff]
        %v1095 = vld [vmem:[%s6 + $0x58] sm:$0xff]
        %v1096 = vld [vmem:[%s6 + $0x60] sm:$0xff]
        %v1097 = vld [vmem:[%s6 + $0x68] sm:$0xff]
        %v1098 = vld [vmem:[%s6 + $0x70] sm:$0xff]
        %v1099 = vld [vmem:[%s6 + $0x78] sm:$0xff]
        %v1100 = vpack.c.bf16 %v1038, %v1036
        %v1101 = vpack.c.bf16 %v1039, %v1037
        %v1102 = vpack.c.bf16 %v1042, %v1040
        %v1103 = vpack.c.bf16 %v1043, %v1041
        %v1104 = vpack.c.bf16 %v1046, %v1044
        %v1105 = vpack.c.bf16 %v1047, %v1045
        %v1106 = vpack.c.bf16 %v1050, %v1048
        %v1107 = vpack.c.bf16 %v1051, %v1049
        %v1108 = vpack.c.bf16 %v1054, %v1052
        %v1109 = vpack.c.bf16 %v1055, %v1053
        %v1110 = vpack.c.bf16 %v1058, %v1056
        %v1111 = vpack.c.bf16 %v1059, %v1057
        %v1112 = vpack.c.bf16 %v1062, %v1060
        %v1113 = vpack.c.bf16 %v1063, %v1061
        %v1114 = vpack.c.bf16 %v1066, %v1064
        %v1115 = vpack.c.bf16 %v1067, %v1065
        %1117 = vset.pattern.permute.xlu0 0
        %1118 = vperm.xlu0 %1117, %v1084
        %v1119 = vpop.permute.xlu0 %1118
        %1122 = vset.pattern.permute.xlu0 0
        %1123 = vperm.xlu0 %1122, %v1085
        %v1124 = vpop.permute.xlu0 %1123
        %1127 = vset.pattern.permute.xlu0 0
        %1128 = vperm.xlu0 %1127, %v1086
        %v1129 = vpop.permute.xlu0 %1128
        %1132 = vset.pattern.permute.xlu0 0
        %1133 = vperm.xlu0 %1132, %v1087
        %v1134 = vpop.permute.xlu0 %1133
        %1137 = vset.pattern.permute.xlu0 0
        %1138 = vperm.xlu0 %1137, %v1088
        %v1139 = vpop.permute.xlu0 %1138
        %1142 = vset.pattern.permute.xlu0 0
        %1143 = vperm.xlu0 %1142, %v1089
        %v1144 = vpop.permute.xlu0 %1143
        %1147 = vset.pattern.permute.xlu0 0
        %1148 = vperm.xlu0 %1147, %v1090
        %v1149 = vpop.permute.xlu0 %1148
        %1152 = vset.pattern.permute.xlu0 0
        %1153 = vperm.xlu0 %1152, %v1091
        %v1154 = vpop.permute.xlu0 %1153
        %1157 = vset.pattern.permute.xlu0 0
        %1158 = vperm.xlu0 %1157, %v1092
        %v1159 = vpop.permute.xlu0 %1158
        %1162 = vset.pattern.permute.xlu0 0
        %1163 = vperm.xlu0 %1162, %v1093
        %v1164 = vpop.permute.xlu0 %1163
        %1167 = vset.pattern.permute.xlu0 0
        %1168 = vperm.xlu0 %1167, %v1094
        %v1169 = vpop.permute.xlu0 %1168
        %1172 = vset.pattern.permute.xlu0 0
        %1173 = vperm.xlu0 %1172, %v1095
        %v1174 = vpop.permute.xlu0 %1173
        %1177 = vset.pattern.permute.xlu0 0
        %1178 = vperm.xlu0 %1177, %v1096
        %v1179 = vpop.permute.xlu0 %1178
        %1182 = vset.pattern.permute.xlu0 0
        %1183 = vperm.xlu0 %1182, %v1097
        %v1184 = vpop.permute.xlu0 %1183
        %1187 = vset.pattern.permute.xlu0 0
        %1188 = vperm.xlu0 %1187, %v1098
        %v1189 = vpop.permute.xlu0 %1188
        %1192 = vset.pattern.permute.xlu0 0
        %1193 = vperm.xlu0 %1192, %v1099
        %v1194 = vpop.permute.xlu0 %1193
        %v1212 = vunpack.c.l.b16 %v1068
        %v1213 = vunpack.c.l.b16 %v1069
        %v1214 = vunpack.c.l.b16 %v1070
        %v1215 = vunpack.c.l.b16 %v1071
        %v1216 = vunpack.c.l.b16 %v1072
        %v1217 = vunpack.c.l.b16 %v1073
        %v1218 = vunpack.c.l.b16 %v1074
        %v1219 = vunpack.c.l.b16 %v1075
        %v1220 = vunpack.c.l.b16 %v1076
        %v1221 = vunpack.c.l.b16 %v1077
        %v1222 = vunpack.c.l.b16 %v1078
        %v1223 = vunpack.c.l.b16 %v1079
        %v1224 = vunpack.c.l.b16 %v1080
        %v1225 = vunpack.c.l.b16 %v1081
        %v1226 = vunpack.c.l.b16 %v1082
        %v1227 = vunpack.c.l.b16 %v1083
        %v1228 = vpack.c.b16 %v1213, %v1212
        %v1229 = vpack.c.b16 %v1215, %v1214
        %v1230 = vpack.c.b16 %v1217, %v1216
        %v1231 = vpack.c.b16 %v1219, %v1218
        %v1232 = vpack.c.b16 %v1221, %v1220
        %v1233 = vpack.c.b16 %v1223, %v1222
        %v1234 = vpack.c.b16 %v1225, %v1224
        %v1235 = vpack.c.b16 %v1227, %v1226
        %1244 = vmatpush.bf16.msra.mxu0 %v1114
        %1245 = vmatpush.bf16.msra.mxu0 %v1112
        %1246 = vmatpush.bf16.msra.mxu0 %v1110
        %1247 = vmatpush.bf16.msra.mxu0 %v1108
        %1248 = vmatpush.bf16.msra.mxu0 %v1106
        %1249 = vmatpush.bf16.msra.mxu0 %v1104
        %1250 = vmatpush.bf16.msra.mxu0 %v1102
        %1251 = vmatpush.bf16.msra.mxu0 %v1100
        %1252 = vmatmul.bf16.gmra.mxu0 %v1228
        %v1253 = vpop.f32.mrf.mxu0
        %v1254 = vadd.f32 %v1119, %v1253
        %v1255 = vpop.f32.mrf.mxu0
        %v1256 = vadd.f32 %v1124, %v1255
        %1257 = vmatmul.bf16.gmra.mxu0 %v1229
        %v1258 = vpop.f32.mrf.mxu0
        %v1259 = vadd.f32 %v1129, %v1258
        %v1260 = vpop.f32.mrf.mxu0
        %v1261 = vadd.f32 %v1134, %v1260
        %1262 = vmatmul.bf16.gmra.mxu0 %v1230
        %v1263 = vpop.f32.mrf.mxu0
        %v1264 = vadd.f32 %v1139, %v1263
        %v1265 = vpop.f32.mrf.mxu0
        %v1266 = vadd.f32 %v1144, %v1265
        %1267 = vmatmul.bf16.gmra.mxu0 %v1231
        %v1268 = vpop.f32.mrf.mxu0
        %v1269 = vadd.f32 %v1149, %v1268
        %v1270 = vpop.f32.mrf.mxu0
        %v1271 = vadd.f32 %v1154, %v1270
        %1272 = vmatmul.bf16.gmra.mxu0 %v1232
        %v1273 = vpop.f32.mrf.mxu0
        %v1274 = vadd.f32 %v1159, %v1273
        %v1275 = vpop.f32.mrf.mxu0
        %v1276 = vadd.f32 %v1164, %v1275
        %1277 = vmatmul.bf16.gmra.mxu0 %v1233
        %v1278 = vpop.f32.mrf.mxu0
        %v1279 = vadd.f32 %v1169, %v1278
        %v1280 = vpop.f32.mrf.mxu0
        %v1281 = vadd.f32 %v1174, %v1280
        %1282 = vmatmul.bf16.gmra.mxu0 %v1234
        %v1283 = vpop.f32.mrf.mxu0
        %v1284 = vadd.f32 %v1179, %v1283
        %v1285 = vpop.f32.mrf.mxu0
        %v1286 = vadd.f32 %v1184, %v1285
        %1287 = vmatmul.bf16.gmra.mxu0 %v1235
        %v1288 = vpop.f32.mrf.mxu0
        %v1289 = vadd.f32 %v1189, %v1288
        %v1290 = vpop.f32.mrf.mxu0
        %v1291 = vadd.f32 %v1194, %v1290
        %1292 = vdwg.mxu0
        %1293 = vmatpush.bf16.msra.mxu0 %v1115
        %1294 = vmatpush.bf16.msra.mxu0 %v1113
        %1295 = vmatpush.bf16.msra.mxu0 %v1111
        %1296 = vmatpush.bf16.msra.mxu0 %v1109
        %1297 = vmatpush.bf16.msra.mxu0 %v1107
        %1298 = vmatpush.bf16.msra.mxu0 %v1105
        %1299 = vmatpush.bf16.msra.mxu0 %v1103
        %1300 = vmatpush.bf16.msra.mxu0 %v1101
        %1301 = vmatmul.bf16.gmra.mxu0 %v1228
        %v1302 = vpop.f32.mrf.mxu0
        %v1303 = vadd.f32 %v1119, %v1302
        %v1304 = vpop.f32.mrf.mxu0
        %v1305 = vadd.f32 %v1124, %v1304
        %1306 = vmatmul.bf16.gmra.mxu0 %v1229
        %v1307 = vpop.f32.mrf.mxu0
        %v1308 = vadd.f32 %v1129, %v1307
        %v1309 = vpop.f32.mrf.mxu0
        %v1310 = vadd.f32 %v1134, %v1309
        %1311 = vmatmul.bf16.gmra.mxu0 %v1230
        %v1312 = vpop.f32.mrf.mxu0
        %v1313 = vadd.f32 %v1139, %v1312
        %v1314 = vpop.f32.mrf.mxu0
        %v1315 = vadd.f32 %v1144, %v1314
        %1316 = vmatmul.bf16.gmra.mxu0 %v1231
        %v1317 = vpop.f32.mrf.mxu0
        %v1318 = vadd.f32 %v1149, %v1317
        %v1319 = vpop.f32.mrf.mxu0
        %v1320 = vadd.f32 %v1154, %v1319
        %1321 = vmatmul.bf16.gmra.mxu0 %v1232
        %v1322 = vpop.f32.mrf.mxu0
        %v1323 = vadd.f32 %v1159, %v1322
        %v1324 = vpop.f32.mrf.mxu0
        %v1325 = vadd.f32 %v1164, %v1324
        %1326 = vmatmul.bf16.gmra.mxu0 %v1233
        %v1327 = vpop.f32.mrf.mxu0
        %v1328 = vadd.f32 %v1169, %v1327
        %v1329 = vpop.f32.mrf.mxu0
        %v1330 = vadd.f32 %v1174, %v1329
        %1331 = vmatmul.bf16.gmra.mxu0 %v1234
        %v1332 = vpop.f32.mrf.mxu0
        %v1333 = vadd.f32 %v1179, %v1332
        %v1334 = vpop.f32.mrf.mxu0
        %v1335 = vadd.f32 %v1184, %v1334
        %1336 = vmatmul.bf16.gmra.mxu0 %v1235
        %v1337 = vpop.f32.mrf.mxu0
        %v1338 = vadd.f32 %v1189, %v1337
        %v1339 = vpop.f32.mrf.mxu0
        %v1340 = vadd.f32 %v1194, %v1339
        %1341 = vdwg.mxu0
        %v1342 = vmax.f32 %v1254, 0.0
        %v1343 = vmax.f32 %v1303, 0.0
        %v1344 = vmax.f32 %v1256, 0.0
        %v1345 = vmax.f32 %v1305, 0.0
        %v1346 = vmax.f32 %v1259, 0.0
        %v1347 = vmax.f32 %v1308, 0.0
        %v1348 = vmax.f32 %v1261, 0.0
        %v1349 = vmax.f32 %v1310, 0.0
        %v1350 = vmax.f32 %v1264, 0.0
        %v1351 = vmax.f32 %v1313, 0.0
        %v1352 = vmax.f32 %v1266, 0.0
        %v1353 = vmax.f32 %v1315, 0.0
        %v1354 = vmax.f32 %v1269, 0.0
        %v1355 = vmax.f32 %v1318, 0.0
        %v1356 = vmax.f32 %v1271, 0.0
        %v1357 = vmax.f32 %v1320, 0.0
        %v1358 = vmax.f32 %v1274, 0.0
        %v1359 = vmax.f32 %v1323, 0.0
        %v1360 = vmax.f32 %v1276, 0.0
        %v1361 = vmax.f32 %v1325, 0.0
        %v1362 = vmax.f32 %v1279, 0.0
        %v1363 = vmax.f32 %v1328, 0.0
        %v1364 = vmax.f32 %v1281, 0.0
        %v1365 = vmax.f32 %v1330, 0.0
        %v1366 = vmax.f32 %v1284, 0.0
        %v1367 = vmax.f32 %v1333, 0.0
        %v1368 = vmax.f32 %v1286, 0.0
        %v1369 = vmax.f32 %v1335, 0.0
        %v1370 = vmax.f32 %v1289, 0.0
        %v1371 = vmax.f32 %v1338, 0.0
        %v1372 = vmax.f32 %v1291, 0.0
        %v1373 = vmax.f32 %v1340, 0.0
        %v1374 = vld [vmem:[%s7] sm:$0xff]
        %v1375 = vld [vmem:[%s7 + $0x8] sm:$0xff]
        %v1376 = vld [vmem:[%s7 + $0x10] sm:$0xff]
        %v1377 = vld [vmem:[%s7 + $0x18] sm:$0xff]
        %v1378 = vld [vmem:[%s7 + $0x20] sm:$0xff]
        %v1379 = vld [vmem:[%s7 + $0x28] sm:$0xff]
        %v1380 = vld [vmem:[%s7 + $0x30] sm:$0xff]
        %v1381 = vld [vmem:[%s7 + $0x38] sm:$0xff]
        %v1382 = vld [vmem:[%s7 + $0x40] sm:$0xff]
        %v1383 = vld [vmem:[%s7 + $0x48] sm:$0xff]
        %v1384 = vld [vmem:[%s7 + $0x50] sm:$0xff]
        %v1385 = vld [vmem:[%s7 + $0x58] sm:$0xff]
        %v1386 = vld [vmem:[%s7 + $0x60] sm:$0xff]
        %v1387 = vld [vmem:[%s7 + $0x68] sm:$0xff]
        %v1388 = vld [vmem:[%s7 + $0x70] sm:$0xff]
        %v1389 = vld [vmem:[%s7 + $0x78] sm:$0xff]
        %v1390 = vld [vmem:[#allocation2] sm:$0x1]
        %1392 = vset.pattern.permute.xlu0 0
        %1393 = vperm.xlu0 %1392, %v1374
        %v1394 = vpop.permute.xlu0 %1393
        %1397 = vset.pattern.permute.xlu0 0
        %1398 = vperm.xlu0 %1397, %v1375
        %v1399 = vpop.permute.xlu0 %1398
        %1402 = vset.pattern.permute.xlu0 0
        %1403 = vperm.xlu0 %1402, %v1376
        %v1404 = vpop.permute.xlu0 %1403
        %1407 = vset.pattern.permute.xlu0 0
        %1408 = vperm.xlu0 %1407, %v1377
        %v1409 = vpop.permute.xlu0 %1408
        %1412 = vset.pattern.permute.xlu0 0
        %1413 = vperm.xlu0 %1412, %v1378
        %v1414 = vpop.permute.xlu0 %1413
        %1417 = vset.pattern.permute.xlu0 0
        %1418 = vperm.xlu0 %1417, %v1379
        %v1419 = vpop.permute.xlu0 %1418
        %1422 = vset.pattern.permute.xlu0 0
        %1423 = vperm.xlu0 %1422, %v1380
        %v1424 = vpop.permute.xlu0 %1423
        %1427 = vset.pattern.permute.xlu0 0
        %1428 = vperm.xlu0 %1427, %v1381
        %v1429 = vpop.permute.xlu0 %1428
        %1432 = vset.pattern.permute.xlu0 0
        %1433 = vperm.xlu0 %1432, %v1382
        %v1434 = vpop.permute.xlu0 %1433
        %1437 = vset.pattern.permute.xlu0 0
        %1438 = vperm.xlu0 %1437, %v1383
        %v1439 = vpop.permute.xlu0 %1438
        %1442 = vset.pattern.permute.xlu0 0
        %1443 = vperm.xlu0 %1442, %v1384
        %v1444 = vpop.permute.xlu0 %1443
        %1447 = vset.pattern.permute.xlu0 0
        %1448 = vperm.xlu0 %1447, %v1385
        %v1449 = vpop.permute.xlu0 %1448
        %1452 = vset.pattern.permute.xlu0 0
        %1453 = vperm.xlu0 %1452, %v1386
        %v1454 = vpop.permute.xlu0 %1453
        %1457 = vset.pattern.permute.xlu0 0
        %1458 = vperm.xlu0 %1457, %v1387
        %v1459 = vpop.permute.xlu0 %1458
        %1462 = vset.pattern.permute.xlu0 0
        %1463 = vperm.xlu0 %1462, %v1388
        %v1464 = vpop.permute.xlu0 %1463
        %1467 = vset.pattern.permute.xlu0 0
        %1468 = vperm.xlu0 %1467, %v1389
        %v1469 = vpop.permute.xlu0 %1468
        %v1471 = vmul.f32 %v1394, %v1342
        %v1472 = vmul.f32 %v1394, %v1343
        %v1473 = vmul.f32 %v1399, %v1344
        %v1474 = vmul.f32 %v1399, %v1345
        %v1475 = vmul.f32 %v1404, %v1346
        %v1476 = vmul.f32 %v1404, %v1347
        %v1477 = vmul.f32 %v1409, %v1348
        %v1478 = vmul.f32 %v1409, %v1349
        %v1479 = vmul.f32 %v1414, %v1350
        %v1480 = vmul.f32 %v1414, %v1351
        %v1481 = vmul.f32 %v1419, %v1352
        %v1482 = vmul.f32 %v1419, %v1353
        %v1483 = vmul.f32 %v1424, %v1354
        %v1484 = vmul.f32 %v1424, %v1355
        %v1485 = vmul.f32 %v1429, %v1356
        %v1486 = vmul.f32 %v1429, %v1357
        %v1487 = vmul.f32 %v1434, %v1358
        %v1488 = vmul.f32 %v1434, %v1359
        %v1489 = vmul.f32 %v1439, %v1360
        %v1490 = vmul.f32 %v1439, %v1361
        %v1491 = vmul.f32 %v1444, %v1362
        %v1492 = vmul.f32 %v1444, %v1363
        %v1493 = vmul.f32 %v1449, %v1364
        %v1494 = vmul.f32 %v1449, %v1365
        %v1495 = vmul.f32 %v1454, %v1366
        %v1496 = vmul.f32 %v1454, %v1367
        %v1497 = vmul.f32 %v1459, %v1368
        %v1498 = vmul.f32 %v1459, %v1369
        %v1499 = vmul.f32 %v1464, %v1370
        %v1500 = vmul.f32 %v1464, %v1371
        %v1501 = vmul.f32 %v1469, %v1372
        %v1502 = vmul.f32 %v1469, %v1373
        %v1503 = vadd.f32 %v1471, %v1473
        %v1504 = vadd.f32 %v1503, %v1475
        %v1505 = vadd.f32 %v1504, %v1477
        %v1506 = vadd.f32 %v1505, %v1479
        %v1507 = vadd.f32 %v1506, %v1481
        %v1508 = vadd.f32 %v1507, %v1483
        %v1509 = vadd.f32 %v1508, %v1485
        %v1510 = vadd.f32 %v1509, %v1487
        %v1511 = vadd.f32 %v1510, %v1489
        %v1512 = vadd.f32 %v1511, %v1491
        %v1513 = vadd.f32 %v1512, %v1493
        %v1514 = vadd.f32 %v1513, %v1495
        %v1515 = vadd.f32 %v1514, %v1497
        %v1516 = vadd.f32 %v1515, %v1499
        %v1517 = vadd.f32 %v1516, %v1501
        %v1518 = vrot.slane %v1517, 4
        %v1519 = vadd.f32 %v1517, %v1518
        %v1520 = vrot.slane %v1519, 2
        %v1521 = vadd.f32 %v1519, %v1520
        %v1522 = vrot.slane %v1521, 1
        %v1523 = vadd.f32 %v1521, %v1522
        %v1524 = vadd.f32 %v1472, %v1474
        %v1525 = vadd.f32 %v1524, %v1476
        %v1526 = vadd.f32 %v1525, %v1478
        %v1527 = vadd.f32 %v1526, %v1480
        %v1528 = vadd.f32 %v1527, %v1482
        %v1529 = vadd.f32 %v1528, %v1484
        %v1530 = vadd.f32 %v1529, %v1486
        %v1531 = vadd.f32 %v1530, %v1488
        %v1532 = vadd.f32 %v1531, %v1490
        %v1533 = vadd.f32 %v1532, %v1492
        %v1534 = vadd.f32 %v1533, %v1494
        %v1535 = vadd.f32 %v1534, %v1496
        %v1536 = vadd.f32 %v1535, %v1498
        %v1537 = vadd.f32 %v1536, %v1500
        %v1538 = vadd.f32 %v1537, %v1502
        %v1539 = vrot.slane %v1538, 4
        %v1540 = vadd.f32 %v1538, %v1539
        %v1541 = vrot.slane %v1540, 2
        %v1542 = vadd.f32 %v1540, %v1541
        %v1543 = vrot.slane %v1542, 1
        %v1544 = vadd.f32 %v1542, %v1543
        %1546 = vset.pattern.permute.xlu0 0
        %1547 = vperm.xlu0 %1546, %v1390
        %v1548 = vpop.permute.xlu0 %1547
        %v1550 = vperm.slane %v1548, 0
        %v1551 = vadd.f32 %v1523, %v1550
        %v1552 = vadd.f32 %v1544, %v1550
        %v1555 = vrot.slane %v1552, 7
        %vm1556 = vcmask 1040384
        %v1557 = vsel %vm1556, %v1551, %v1555
        %v1559 = vlaneseq
        %vm1560 = vcmp.ge.s32.totalorder %v1559, 0
        %vm1561 = vcmp.lt.s32.totalorder %v1559, 256
        %vm1562 = vmand %vm1560, %vm1561
        %1563 = vst.msk [vmem:[%s344] sm:$0x3] %vm1562, %v1557
        %s1564 = sand.u32 %s232, 1
        %s1565 = scalar_lea.sflag [#allocation4], %s1564
        %s1566 = sand.u32 %s232, 1
        %s1567 = smul.addr %s1566, 2
        %s1568 = scalar_lea.vmem [#allocation3], %s1567
        // Predicated region
        $region57: #{tpu_custom_call.1} parent=55 // pred_check
          %p1569 = pneg %p242
        $region58: #{tpu_custom_call.1} parent=55 // pred_check_branch
          %1571 = sbr.rel (%p1569) target = $region60
        $region59: #{tpu_custom_call.1} parent=55 // pred_region
          %s1572 = smul.u32 2, %s25
          %1574 = vsyncadd %s1565, 0
          %s1575 = scalar_lea.hbm %s9, %s1572
          %s1577 = sshll.u32 %s1568, 4
          %s1578 = int_to_ptr.vmem [resolvable:$true] %s1577
          %s1579 = sshll.u32 %s1575, 4
          %s1580 = int_to_ptr.hbm [resolvable:$true] %s1579
          %1582 = dma.vmem_to_hbm [thread:$0]  %s1578, 32, %s1580, %s1565
        $region60: #{tpu_custom_call.1} parent=55 // pred_fallthru
          _
      $region56: #{tpu_custom_call.1} parent=5 // pred_fallthru
        _
      %p1583 = scmp.le.s32.totalorder 2, %s20
      // Predicated region
      $region61: #{tpu_custom_call.1} parent=5 // pred_check
        %p1584 = pneg %p1583
      $region62: #{tpu_custom_call.1} parent=5 // pred_check_branch
        %1586 = sbr.rel (%p1584) target = $region64
      $region63: #{tpu_custom_call.1} parent=5 // pred_region
        %s1587 = ssub.s32 %s20, 2
        // Predicated region
        $region65: #{tpu_custom_call.1} parent=63 // pred_check
          %p1588 = pneg %p248
        $region66: #{tpu_custom_call.1} parent=63 // pred_check_branch
          %1590 = sbr.rel (%p1588) target = $region68
        $region67: #{tpu_custom_call.1} parent=63 // pred_region
          %s1591 = sand.u32 %s233, 1
          %s1592 = scalar_lea.sflag [#allocation4], %s1591
          %s1593 = sand.u32 %s233, 1
          %s1594 = smul.addr %s1593, 2
          %s1595 = scalar_lea.vmem [#allocation3], %s1594
          %1597 = dma.done %s1592, 32
        $region68: #{tpu_custom_call.1} parent=63 // pred_fallthru
          _
      $region64: #{tpu_custom_call.1} parent=5 // pred_fallthru
        _
    $region6: #{tpu_custom_call.1} parent=1 // loop_footer
      %s24 = sadd.s32 1, %s20
    $region7: #{tpu_custom_call.1} parent=1 // loop_footer_branch
      %19 = sbr.rel target = $region3
    $region8: #{tpu_custom_call.1} parent=1 // loop_exit
      _
    %1598 = vsyncpa [#allocation4], 1
    %s1599 = scalar_lea.sflag [#allocation4], 1
    %1600 = vsyncpa %s1599, 1

</llo_original>
